<compile_context>
chip_gen: v7x
topology: tpu7x:2x2x1
jax: 0.10.0
libtpu: 0.0.40
codegen_flags: <defaults>
</compile_context>

<pallas_src>
import math

import numpy as np
import jax
import jax.numpy as jnp
from jax.experimental import pallas as pl
from jax.experimental.pallas import tpu as pltpu


# ---------------------------------------------------------------------------
# Position-embedding table construction (init-time numpy, same as PyTorch).
# ---------------------------------------------------------------------------

def create_gradient_grid(samples_per_dim, value_range=(-1.0, 1.0)):
    """Grid of linearly spaced positions, shape (*samples_per_dim, ndim)."""
    s = [np.linspace(value_range[0], value_range[1], n) for n in samples_per_dim]
    return np.stack(np.meshgrid(*s, sparse=False, indexing="ij"),
                    axis=-1).astype(np.float32)


def convert_to_fourier_features(inputs, basis_degree):
    """[sin(2^j x), cos(2^j x)]; output dim = 2 * ndim * basis_degree."""
    n_dims = inputs.shape[-1]
    freq_basis = np.concatenate(
        [2.0 ** i * np.eye(n_dims) for i in range(basis_degree)], axis=1)
    x = inputs @ freq_basis
    return np.sin(np.concatenate([x, x + 0.5 * np.pi], axis=-1)).astype(np.float32)


# ---------------------------------------------------------------------------
# Pallas kernels.
# ---------------------------------------------------------------------------

def _project_add_kernel(x_ref, proj_ref, o_ref):
    # x_ref/o_ref: (B, tp, D) activation tile, proj_ref: (tp, D) batch-invariant
    # projected position embedding.  Pure streaming add; proj broadcasts over B.
    o_ref[...] = x_ref[...] + proj_ref[...]


def _concat_kernel(x_ref, pos_ref, o_ref):
    # x_ref: (B, tp, D), pos_ref: (tp, E), o_ref: (B, tp, D + E).
    # Two stores: the x slice is 128-lane aligned; the pos slice starts at a
    # vreg boundary when D is a multiple of 128.  (D+E output width is
    # dictated by the op semantics and cannot be made a multiple of 128.)
    b, tp, d = x_ref.shape
    e = pos_ref.shape[-1]
    o_ref[:, :, :d] = x_ref[...].astype(o_ref.dtype)
    o_ref[:, :, d:] = jnp.broadcast_to(
        pos_ref[...].astype(o_ref.dtype)[None], (b, tp, e))


# ---------------------------------------------------------------------------
# Tile selection.
# ---------------------------------------------------------------------------

_TARGET_BLOCK_BYTES = 2 * 1024 * 1024   # ~2 MiB per block: >=85% HBM roofline,
                                        # ~10 MiB double-buffered (fits v5e's
                                        # 16 MiB scoped default, v7x's 64 MiB).


def _choose_tile(num_positions, bytes_per_position, target=_TARGET_BLOCK_BYTES):
    """Pick a position-tile size (multiple of 8) targeting ~`target` bytes/block.

    Returns (tile, padded_num_positions).  Small problems collapse to a single
    block (fast path); ragged P is padded up to a multiple of the tile.
    """
    fit = max(1, target // max(1, bytes_per_position))
    if num_positions <= fit:
        tp = ((num_positions + 7) // 8) * 8          # one block, pad to x8
        return tp, tp
    tp = max(8, (fit // 8) * 8)
    p_pad = ((num_positions + tp - 1) // tp) * tp
    return tp, p_pad


def _pad_positions(arr, axis, new_size):
    old = arr.shape[axis]
    if new_size == old:
        return arr
    pad = [(0, 0)] * arr.ndim
    pad[axis] = (0, new_size - old)
    return jnp.pad(arr, pad)


_COMPILER_PARAMS = pltpu.CompilerParams(
    dimension_semantics=("parallel",),      # independent position tiles
    vmem_limit_bytes=32 * 1024 * 1024)      # headroom; safe on v5e/v6e/v7x


# ---------------------------------------------------------------------------
# pallas_call wrappers.
# ---------------------------------------------------------------------------

def position_project_add(x3, proj2, *, target_block_bytes=_TARGET_BLOCK_BYTES,
                         donate_input=False):
    """x3: (B, P, D), proj2: (P, D) (already projected, same dtype as x3)."""
    B, P, D = x3.shape
    itemsize = jnp.dtype(x3.dtype).itemsize
    tp, p_pad = _choose_tile(P, B * D * itemsize, target_block_bytes)
    x3 = _pad_positions(x3, 1, p_pad)
    proj2 = _pad_positions(proj2, 0, p_pad)

    kwargs = {}
    if donate_input:
        # Optional: halves HBM footprint; left off by default because in eager
        # mode XLA may insert a defensive copy when x is still live elsewhere.
        kwargs["input_output_aliases"] = {0: 0}

    out = pl.pallas_call(
        _project_add_kernel,
        out_shape=jax.ShapeDtypeStruct((B, p_pad, D), x3.dtype),
        grid=(p_pad // tp,),
        in_specs=[
            pl.BlockSpec((B, tp, D), lambda t: (0, t, 0)),   # x tile (batch folded)
            pl.BlockSpec((tp, D), lambda t: (t, 0)),         # projected pos tile
        ],
        out_specs=pl.BlockSpec((B, tp, D), lambda t: (0, t, 0)),
        compiler_params=_COMPILER_PARAMS,
        **kwargs,
    )(x3, proj2)
    return out if p_pad == P else out[:, :P]


def position_concat(x3, pos2, *, target_block_bytes=_TARGET_BLOCK_BYTES):
    """x3: (B, P, D), pos2: (P, E) -> (B, P, D + E)."""
    B, P, D = x3.shape
    E = pos2.shape[-1]
    itemsize = jnp.dtype(x3.dtype).itemsize
    tp, p_pad = _choose_tile(P, B * (D + E) * itemsize, target_block_bytes)
    x3 = _pad_positions(x3, 1, p_pad)
    pos2 = _pad_positions(pos2, 0, p_pad)

    out = pl.pallas_call(
        _concat_kernel,
        out_shape=jax.ShapeDtypeStruct((B, p_pad, D + E), x3.dtype),
        grid=(p_pad // tp,),
        in_specs=[
            pl.BlockSpec((B, tp, D), lambda t: (0, t, 0)),
            pl.BlockSpec((tp, E), lambda t: (t, 0)),
        ],
        out_specs=pl.BlockSpec((B, tp, D + E), lambda t: (0, t, 0)),
        compiler_params=_COMPILER_PARAMS,
    )(x3, pos2)
    return out if p_pad == P else out[:, :P]


# ---------------------------------------------------------------------------
# Module wrapper (forward-pass semantics of savi PositionEmbedding).
# ---------------------------------------------------------------------------

class PositionEmbeddingPallas:
    """N-dimensional position embedding with a fused Pallas update on TPU."""

    def __init__(self, input_shape, embedding_type, update_type,
                 num_fourier_bases=0, gaussian_sigma=1.0,
                 pos_transform=None, output_transform=None,
                 trainable_pos_embedding=False, param_key=None):
        self.input_shape = tuple(input_shape)
        self.embedding_type = embedding_type
        self.update_type = update_type
        self.num_fourier_bases = num_fourier_bases
        self.gaussian_sigma = gaussian_sigma
        self.pos_transform = pos_transform          # None == Identity
        self.output_transform = output_transform    # None == Identity
        self.trainable_pos_embedding = trainable_pos_embedding

        self.pos_embedding = self._make_pos_embedding_tensor(self.input_shape)

        self._proj_table_f32 = None
        self._proj_cache = {}
        if self.update_type == "project_add":
            d = self.input_shape[-1]
            e = self.pos_embedding.shape[-1]
            if param_key is None:
                param_key = jax.random.PRNGKey(0)
            kw, kb = jax.random.split(param_key)
            # TODO(synk): the reference module uses init_fn[weight_init[...]];
            # here we mimic torch.nn.Linear's default uniform(+/- 1/sqrt(in)).
            bound = 1.0 / math.sqrt(e)
            w = jax.random.uniform(kw, (d, e), jnp.float32, -bound, bound)  # (out, in)
            b = jax.random.uniform(kb, (d,), jnp.float32, -bound, bound)
            self.w_t = jnp.transpose(w)       # (e, d)
            self.b2d = b.reshape(1, d)        # (1, d)
            # Hoisted, batch-invariant projection table (perf feedback): the
            # matmul is done once here, never inside the streaming kernel.
            if self.pos_transform is None:
                pos2 = self.pos_embedding.reshape(-1, e)
                self._proj_table_f32 = pos2 @ self.w_t + self.b2d   # (P, d) f32

    def _make_pos_embedding_tensor(self, input_shape):
        if self.embedding_type == "discrete_1d":
            idx = np.broadcast_to(np.arange(input_shape[-2]), input_shape[1:-1])
            pe = np.eye(input_shape[-2], dtype=np.float32)[idx]      # one-hot
        else:
            grid = create_gradient_grid(input_shape[1:-1], (-1.0, 1.0))
            if self.embedding_type == "linear":
                pe = grid
            elif self.embedding_type == "fourier":
                pe = convert_to_fourier_features(grid * np.pi, self.num_fourier_bases)
            elif self.embedding_type == "gaussian_fourier":
                n_dims = grid.shape[-1]
                # TODO(synk): reference uses global np.random.normal; seeded
                # rng used here for determinism (values will differ bit-wise).
                proj = (np.random.default_rng(0)
                        .normal(size=[n_dims, self.num_fourier_bases])
                        * self.gaussian_sigma)
                pe = np.pi * grid.dot(proj)
                pe = np.sin(np.concatenate([pe, pe + 0.5 * np.pi], axis=-1))
            else:
                raise ValueError("Invalid embedding type provided.")
        return jnp.asarray(pe, jnp.float32)[None]    # (1, *spatial, E)

    def _projection(self, pos2, dtype):
        """Batch-invariant (P, D) projection table in the activation dtype."""
        if self._proj_table_f32 is not None:
            key = jnp.dtype(dtype).name
            if key not in self._proj_cache:
                self._proj_cache[key] = self._proj_table_f32.astype(dtype)
            return self._proj_cache[key]
        # pos_transform supplied -> projection depends on it; tiny XLA matmul.
        return (pos2 @ self.w_t + self.b2d).astype(dtype)

    def __call__(self, inputs):
        pos = self.pos_embedding
        if not self.trainable_pos_embedding:
            pos = jax.lax.stop_gradient(pos)         # requires_grad=False analogue
        if self.pos_transform is not None:
            pos = self.pos_transform(pos)

        batch = inputs.shape[0]
        spatial = inputs.shape[1:-1]
        d = inputs.shape[-1]
        e = pos.shape[-1]
        num_pos = int(np.prod(spatial))

        x3 = inputs.reshape(batch, num_pos, d)
        pos2 = pos.reshape(num_pos, e)

        if self.update_type == "project_add":
            proj2 = self._projection(pos2, inputs.dtype)     # (P, D)
            out = position_project_add(x3, proj2)
            out = out.reshape(inputs.shape)
        elif self.update_type == "concat":
            out = position_concat(x3, pos2)
            out = out.reshape(*inputs.shape[:-1], d + e)
        else:
            raise ValueError("Invalid update type provided.")

        if self.output_transform is not None:
            out = self.output_transform(out)
        return out


# ---------------------------------------------------------------------------
# Demo + reference check.
# ---------------------------------------------------------------------------

if __name__ == "__main__":
    rng = jax.random.PRNGKey(0)
    k_x, k_p, k_x2 = jax.random.split(rng, 3)

    ok = True

    # ---- project_add with Fourier position embedding (B, H, W, D) ----------
    B, H, W, D = 2, 16, 16, 128
    x = jax.random.normal(k_x, (B, H, W, D), jnp.float32)

    pe_proj = PositionEmbeddingPallas(
        input_shape=(B, H, W, D), embedding_type="fourier",
        update_type="project_add", num_fourier_bases=4, param_key=k_p)
    out_proj = pe_proj(x)
    jax.block_until_ready(out_proj)

    pos2 = pe_proj.pos_embedding.reshape(-1, pe_proj.pos_embedding.shape[-1])
    ref_proj = (x.reshape(B, -1, D)
                + (pos2 @ pe_proj.w_t + pe_proj.b2d)[None]).reshape(x.shape)
    ok &= out_proj.shape == x.shape
    ok &= bool(jnp.allclose(out_proj, ref_proj, atol=1e-4, rtol=1e-4))

    # ---- concat with linear position embedding ------------------------------
    pe_cat = PositionEmbeddingPallas(
        input_shape=(B, H, W, D), embedding_type="linear", update_type="concat")
    out_cat = pe_cat(x)
    jax.block_until_ready(out_cat)

    pos_lin = pe_cat.pos_embedding                          # (1, H, W, 2)
    ref_cat = jnp.concatenate(
        [x, jnp.broadcast_to(pos_lin, (B, H, W, pos_lin.shape[-1]))], axis=-1)
    ok &= out_cat.shape == ref_cat.shape
    ok &= bool(jnp.array_equal(out_cat, ref_cat))

    # ---- ragged position count (H=W=7 -> P=49, exercises pad+slice path) ---
    B2, H2, W2 = 2, 7, 7
    x2 = jax.random.normal(k_x2, (B2, H2, W2, D), jnp.float32)
    pe_rag = PositionEmbeddingPallas(
        input_shape=(B2, H2, W2, D), embedding_type="fourier",
        update_type="project_add", num_fourier_bases=2, param_key=k_p)
    out_rag = pe_rag(x2)
    jax.block_until_ready(out_rag)

    pos2r = pe_rag.pos_embedding.reshape(-1, pe_rag.pos_embedding.shape[-1])
    ref_rag = (x2.reshape(B2, -1, D)
               + (pos2r @ pe_rag.w_t + pe_rag.b2d)[None]).reshape(x2.shape)
    ok &= out_rag.shape == x2.shape
    ok &= bool(jnp.allclose(out_rag, ref_rag, atol=1e-4, rtol=1e-4))

    print("KERNEL_OK" if ok else "KERNEL_MISMATCH")
</pallas_src>

<mosaic_0001>
module attributes {stable_mosaic.version = 11 : i64} {
  func.func @_project_add_kernel(%arg0: i32, %arg1: memref<2x256x128xf32, #tpu.memory_space<vmem>>, %arg2: memref<256x128xf32, #tpu.memory_space<vmem>>, %arg3: memref<2x256x128xf32, #tpu.memory_space<vmem>>) attributes {dimension_semantics = [#tpu.dimension_semantics<parallel>], iteration_bounds = array<i64: 1>, scalar_prefetch = 0 : i64, scratch_operands = 0 : i64, tpu.core_type = #tpu.core_type<tc>, window_params = [{transform_indices = @transform_0, window_bounds = array<i64: 2, 256, 128>}, {transform_indices = @transform_1, window_bounds = array<i64: 256, 128>}, {transform_indices = @transform_2, window_bounds = array<i64: 2, 256, 128>}]} {
    %c0 = arith.constant 0 : index
    %c0_0 = arith.constant 0 : index
    %c0_1 = arith.constant 0 : index
    %0 = vector.load %arg1[%c0, %c0_0, %c0_1] : memref<2x256x128xf32, #tpu.memory_space<vmem>>, vector<2x256x128xf32>
    %c0_2 = arith.constant 0 : index
    %c0_3 = arith.constant 0 : index
    %1 = vector.load %arg2[%c0_2, %c0_3] : memref<256x128xf32, #tpu.memory_space<vmem>>, vector<256x128xf32>
    %2 = vector.shape_cast %1 : vector<256x128xf32> to vector<1x256x128xf32>
    %3 = vector.broadcast %2 : vector<1x256x128xf32> to vector<2x256x128xf32>
    %4 = arith.addf %0, %3 : vector<2x256x128xf32>
    %c0_4 = arith.constant 0 : index
    %c0_5 = arith.constant 0 : index
    %c0_6 = arith.constant 0 : index
    %5 = vector.load %arg3[%c0_4, %c0_5, %c0_6] : memref<2x256x128xf32, #tpu.memory_space<vmem>>, vector<2x256x128xf32>
    tpu.vector_store %arg3[%c0_4, %c0_5, %c0_6], %4 {strides = array<i32>} : memref<2x256x128xf32, #tpu.memory_space<vmem>>, vector<2x256x128xf32>,
    return
  }
  func.func @transform_0(%arg0: i32) -> (i32, i32, i32) {
    %c0_i32 = arith.constant 0 : i32
    %c0_i32_0 = arith.constant 0 : i32
    %c0_i32_1 = arith.constant 0 : i32
    return %c0_i32, %arg0, %c0_i32_0 : i32, i32, i32
  }
  func.func @transform_1(%arg0: i32) -> (i32, i32) {
    %c0_i32 = arith.constant 0 : i32
    %c0_i32_0 = arith.constant 0 : i32
    return %arg0, %c0_i32 : i32, i32
  }
  func.func @transform_2(%arg0: i32) -> (i32, i32, i32) {
    %c0_i32 = arith.constant 0 : i32
    %c0_i32_0 = arith.constant 0 : i32
    %c0_i32_1 = arith.constant 0 : i32
    return %c0_i32, %arg0, %c0_i32_0 : i32, i32, i32
  }
}

</mosaic_0001>

<llo_original>
// kernel: tpu_custom_call.1
$region0: #{tpu_custom_call.1}
  #allocation0 [shape = 'u32[]', space=smem, size = 0x4, offset = 0x4, fixed_abs, tag = 'smem constant byte address 0x4 - core index']
  #allocation1 [shape = 'u32[144,128]{1,0:T(1,128)}', space=vmem, size = 0x12000, scoped, tag = 'internal scratch']
  %s0 = inlined_call_operand.hbm [shape: f32[2,256,128], index: 0, kind: input, shape index: {}]
  %s1 = inlined_call_operand.hbm [shape: f32[256,128], index: 1, kind: input, shape index: {}]
  %s2 = inlined_call_operand.hbm [shape: f32[2,256,128], index: 2, kind: output, shape index: {}]
  %s3 = sld [smem:[#allocation0]]
  $region26: #{tpu_custom_call.1} parent=0
    _
  %s5 = ssub.s32 1, %s3
  %s6 = scalar_select 0, %s5, %s3
  $region1: #{tpu_custom_call.1} parent=0
    #allocation2 [shape = 'u8[262144]{0}', space=vmem, size = 0x40000, scoped, tag = 'input window, operand 0, single buffered']
    #allocation3 [shape = 's32[1]{0}', space=sflag, size = 0x4, scoped, tag = 'scoped memory for tpu_custom_call.1']
    #allocation4 [shape = 's32[1]{0}', space=sflag, size = 0x4, scoped, tag = 'scoped memory for tpu_custom_call.1']
    #allocation5 [shape = 'u8[131072]{0}', space=vmem, size = 0x20000, scoped, tag = 'input window, operand 1, single buffered']
    #allocation6 [shape = 's32[1]{0}', space=sflag, size = 0x4, scoped, tag = 'scoped memory for tpu_custom_call.1']
    #allocation7 [shape = 'u8[262144]{0}', space=vmem, size = 0x40000, scoped, tag = 'output window, operand 0, single buffered']
    %7 = vsyncpa [#allocation3], 0
    %8 = vsyncpa [#allocation6], 0
    %9 = vsyncpa [#allocation4], 0
    // Predicated region
    $region2: #{tpu_custom_call.1} parent=1 // pred_check
      _
    $region3: #{tpu_custom_call.1} parent=1 // pred_check_branch
      %11 = sbr.rel (0) target = $region5
    $region4: #{tpu_custom_call.1} parent=1 // pred_region
      %s13 = ssub.s32 8192, 8192
      %14 = vsyncadd [#allocation3], %s13
      %s15 = sshll.u32 [#allocation2], 4
      %s16 = int_to_ptr.vmem [resolvable:$true] %s15
      %21 = dma.hbm_to_vmem [thread:$0]  %s0, 8192, %s16, [#allocation3], 128, 128, 8
    $region5: #{tpu_custom_call.1} parent=1 // pred_fallthru
      _
    // Predicated region
    $region6: #{tpu_custom_call.1} parent=1 // pred_check
      _
    $region7: #{tpu_custom_call.1} parent=1 // pred_check_branch
      %23 = sbr.rel (0) target = $region9
    $region8: #{tpu_custom_call.1} parent=1 // pred_region
      %s25 = ssub.s32 4096, 4096
      %26 = vsyncadd [#allocation6], %s25
      %s27 = sshll.u32 [#allocation5], 4
      %s28 = int_to_ptr.vmem [resolvable:$true] %s27
      %33 = dma.hbm_to_vmem [thread:$0]  %s1, 4096, %s28, [#allocation6], 128, 128, 8
    $region9: #{tpu_custom_call.1} parent=1 // pred_fallthru
      _
    // Predicated region
    $region10: #{tpu_custom_call.1} parent=1 // pred_check
      _
    $region11: #{tpu_custom_call.1} parent=1 // pred_check_branch
      %35 = sbr.rel (0) target = $region13
    $region12: #{tpu_custom_call.1} parent=1 // pred_region
      %36 = dma.done [#allocation3], 8192
    $region13: #{tpu_custom_call.1} parent=1 // pred_fallthru
      _
    // Predicated region
    $region14: #{tpu_custom_call.1} parent=1 // pred_check
      _
    $region15: #{tpu_custom_call.1} parent=1 // pred_check_branch
      %38 = sbr.rel (0) target = $region17
    $region16: #{tpu_custom_call.1} parent=1 // pred_region
      %39 = dma.done [#allocation6], 4096
    $region17: #{tpu_custom_call.1} parent=1 // pred_fallthru
      _
    %v40 = vld [vmem:[#allocation2] sm:$0xff]
    %v41 = vld [vmem:[#allocation2 + $0x8] sm:$0xff]
    %v42 = vld [vmem:[#allocation2 + $0x10] sm:$0xff]
    %v43 = vld [vmem:[#allocation2 + $0x18] sm:$0xff]
    %v44 = vld [vmem:[#allocation2 + $0x20] sm:$0xff]
    %v45 = vld [vmem:[#allocation2 + $0x28] sm:$0xff]
    %v46 = vld [vmem:[#allocation2 + $0x30] sm:$0xff]
    %v47 = vld [vmem:[#allocation2 + $0x38] sm:$0xff]
    %v48 = vld [vmem:[#allocation2 + $0x40] sm:$0xff]
    %v49 = vld [vmem:[#allocation2 + $0x48] sm:$0xff]
    %v50 = vld [vmem:[#allocation2 + $0x50] sm:$0xff]
    %v51 = vld [vmem:[#allocation2 + $0x58] sm:$0xff]
    %v52 = vld [vmem:[#allocation2 + $0x60] sm:$0xff]
    %v53 = vld [vmem:[#allocation2 + $0x68] sm:$0xff]
    %v54 = vld [vmem:[#allocation2 + $0x70] sm:$0xff]
    %v55 = vld [vmem:[#allocation2 + $0x78] sm:$0xff]
    %v56 = vld [vmem:[#allocation2 + $0x80] sm:$0xff]
    %v57 = vld [vmem:[#allocation2 + $0x88] sm:$0xff]
    %v58 = vld [vmem:[#allocation2 + $0x90] sm:$0xff]
    %v59 = vld [vmem:[#allocation2 + $0x98] sm:$0xff]
    %v60 = vld [vmem:[#allocation2 + $0xa0] sm:$0xff]
    %v61 = vld [vmem:[#allocation2 + $0xa8] sm:$0xff]
    %v62 = vld [vmem:[#allocation2 + $0xb0] sm:$0xff]
    %v63 = vld [vmem:[#allocation2 + $0xb8] sm:$0xff]
    %v64 = vld [vmem:[#allocation2 + $0xc0] sm:$0xff]
    %v65 = vld [vmem:[#allocation2 + $0xc8] sm:$0xff]
    %v66 = vld [vmem:[#allocation2 + $0xd0] sm:$0xff]
    %v67 = vld [vmem:[#allocation2 + $0xd8] sm:$0xff]
    %v68 = vld [vmem:[#allocation2 + $0xe0] sm:$0xff]
    %v69 = vld [vmem:[#allocation2 + $0xe8] sm:$0xff]
    %v70 = vld [vmem:[#allocation2 + $0xf0] sm:$0xff]
    %v71 = vld [vmem:[#allocation2 + $0xf8] sm:$0xff]
    %v72 = vld [vmem:[#allocation2 + $0x100] sm:$0xff]
    %v73 = vld [vmem:[#allocation2 + $0x108] sm:$0xff]
    %v74 = vld [vmem:[#allocation2 + $0x110] sm:$0xff]
    %v75 = vld [vmem:[#allocation2 + $0x118] sm:$0xff]
    %v76 = vld [vmem:[#allocation2 + $0x120] sm:$0xff]
    %v77 = vld [vmem:[#allocation2 + $0x128] sm:$0xff]
    %v78 = vld [vmem:[#allocation2 + $0x130] sm:$0xff]
    %v79 = vld [vmem:[#allocation2 + $0x138] sm:$0xff]
    %v80 = vld [vmem:[#allocation2 + $0x140] sm:$0xff]
    %v81 = vld [vmem:[#allocation2 + $0x148] sm:$0xff]
    %v82 = vld [vmem:[#allocation2 + $0x150] sm:$0xff]
    %v83 = vld [vmem:[#allocation2 + $0x158] sm:$0xff]
    %v84 = vld [vmem:[#allocation2 + $0x160] sm:$0xff]
    %v85 = vld [vmem:[#allocation2 + $0x168] sm:$0xff]
    %v86 = vld [vmem:[#allocation2 + $0x170] sm:$0xff]
    %v87 = vld [vmem:[#allocation2 + $0x178] sm:$0xff]
    %v88 = vld [vmem:[#allocation2 + $0x180] sm:$0xff]
    %v89 = vld [vmem:[#allocation2 + $0x188] sm:$0xff]
    %v90 = vld [vmem:[#allocation2 + $0x190] sm:$0xff]
    %v91 = vld [vmem:[#allocation2 + $0x198] sm:$0xff]
    %v92 = vld [vmem:[#allocation2 + $0x1a0] sm:$0xff]
    %v93 = vld [vmem:[#allocation2 + $0x1a8] sm:$0xff]
    %v94 = vld [vmem:[#allocation2 + $0x1b0] sm:$0xff]
    %v95 = vld [vmem:[#allocation2 + $0x1b8] sm:$0xff]
    %v96 = vld [vmem:[#allocation2 + $0x1c0] sm:$0xff]
    %v97 = vld [vmem:[#allocation2 + $0x1c8] sm:$0xff]
    %v98 = vld [vmem:[#allocation2 + $0x1d0] sm:$0xff]
    %v99 = vld [vmem:[#allocation2 + $0x1d8] sm:$0xff]
    %v100 = vld [vmem:[#allocation2 + $0x1e0] sm:$0xff]
    %v101 = vld [vmem:[#allocation2 + $0x1e8] sm:$0xff]
    %v102 = vld [vmem:[#allocation2 + $0x1f0] sm:$0xff]
    %v103 = vld [vmem:[#allocation2 + $0x1f8] sm:$0xff]
    %v104 = vld [vmem:[#allocation5] sm:$0xff]
    %v105 = vld [vmem:[#allocation5 + $0x8] sm:$0xff]
    %v106 = vld [vmem:[#allocation5 + $0x10] sm:$0xff]
    %v107 = vld [vmem:[#allocation5 + $0x18] sm:$0xff]
    %v108 = vld [vmem:[#allocation5 + $0x20] sm:$0xff]
    %v109 = vld [vmem:[#allocation5 + $0x28] sm:$0xff]
    %v110 = vld [vmem:[#allocation5 + $0x30] sm:$0xff]
    %v111 = vld [vmem:[#allocation5 + $0x38] sm:$0xff]
    %v112 = vld [vmem:[#allocation5 + $0x40] sm:$0xff]
    %v113 = vld [vmem:[#allocation5 + $0x48] sm:$0xff]
    %v114 = vld [vmem:[#allocation5 + $0x50] sm:$0xff]
    %v115 = vld [vmem:[#allocation5 + $0x58] sm:$0xff]
    %v116 = vld [vmem:[#allocation5 + $0x60] sm:$0xff]
    %v117 = vld [vmem:[#allocation5 + $0x68] sm:$0xff]
    %v118 = vld [vmem:[#allocation5 + $0x70] sm:$0xff]
    %v119 = vld [vmem:[#allocation5 + $0x78] sm:$0xff]
    %v120 = vld [vmem:[#allocation5 + $0x80] sm:$0xff]
    %v121 = vld [vmem:[#allocation5 + $0x88] sm:$0xff]
    %v122 = vld [vmem:[#allocation5 + $0x90] sm:$0xff]
    %v123 = vld [vmem:[#allocation5 + $0x98] sm:$0xff]
    %v124 = vld [vmem:[#allocation5 + $0xa0] sm:$0xff]
    %v125 = vld [vmem:[#allocation5 + $0xa8] sm:$0xff]
    %v126 = vld [vmem:[#allocation5 + $0xb0] sm:$0xff]
    %v127 = vld [vmem:[#allocation5 + $0xb8] sm:$0xff]
    %v128 = vld [vmem:[#allocation5 + $0xc0] sm:$0xff]
    %v129 = vld [vmem:[#allocation5 + $0xc8] sm:$0xff]
    %v130 = vld [vmem:[#allocation5 + $0xd0] sm:$0xff]
    %v131 = vld [vmem:[#allocation5 + $0xd8] sm:$0xff]
    %v132 = vld [vmem:[#allocation5 + $0xe0] sm:$0xff]
    %v133 = vld [vmem:[#allocation5 + $0xe8] sm:$0xff]
    %v134 = vld [vmem:[#allocation5 + $0xf0] sm:$0xff]
    %v135 = vld [vmem:[#allocation5 + $0xf8] sm:$0xff]
    %v136 = vadd.f32 %v40, %v104
    %v137 = vadd.f32 %v41, %v105
    %v138 = vadd.f32 %v42, %v106
    %v139 = vadd.f32 %v43, %v107
    %v140 = vadd.f32 %v44, %v108
    %v141 = vadd.f32 %v45, %v109
    %v142 = vadd.f32 %v46, %v110
    %v143 = vadd.f32 %v47, %v111
    %v144 = vadd.f32 %v48, %v112
    %v145 = vadd.f32 %v49, %v113
    %v146 = vadd.f32 %v50, %v114
    %v147 = vadd.f32 %v51, %v115
    %v148 = vadd.f32 %v52, %v116
    %v149 = vadd.f32 %v53, %v117
    %v150 = vadd.f32 %v54, %v118
    %v151 = vadd.f32 %v55, %v119
    %v152 = vadd.f32 %v56, %v120
    %v153 = vadd.f32 %v57, %v121
    %v154 = vadd.f32 %v58, %v122
    %v155 = vadd.f32 %v59, %v123
    %v156 = vadd.f32 %v60, %v124
    %v157 = vadd.f32 %v61, %v125
    %v158 = vadd.f32 %v62, %v126
    %v159 = vadd.f32 %v63, %v127
    %v160 = vadd.f32 %v64, %v128
    %v161 = vadd.f32 %v65, %v129
    %v162 = vadd.f32 %v66, %v130
    %v163 = vadd.f32 %v67, %v131
    %v164 = vadd.f32 %v68, %v132
    %v165 = vadd.f32 %v69, %v133
    %v166 = vadd.f32 %v70, %v134
    %v167 = vadd.f32 %v71, %v135
    %v168 = vadd.f32 %v72, %v104
    %v169 = vadd.f32 %v73, %v105
    %v170 = vadd.f32 %v74, %v106
    %v171 = vadd.f32 %v75, %v107
    %v172 = vadd.f32 %v76, %v108
    %v173 = vadd.f32 %v77, %v109
    %v174 = vadd.f32 %v78, %v110
    %v175 = vadd.f32 %v79, %v111
    %v176 = vadd.f32 %v80, %v112
    %v177 = vadd.f32 %v81, %v113
    %v178 = vadd.f32 %v82, %v114
    %v179 = vadd.f32 %v83, %v115
    %v180 = vadd.f32 %v84, %v116
    %v181 = vadd.f32 %v85, %v117
    %v182 = vadd.f32 %v86, %v118
    %v183 = vadd.f32 %v87, %v119
    %v184 = vadd.f32 %v88, %v120
    %v185 = vadd.f32 %v89, %v121
    %v186 = vadd.f32 %v90, %v122
    %v187 = vadd.f32 %v91, %v123
    %v188 = vadd.f32 %v92, %v124
    %v189 = vadd.f32 %v93, %v125
    %v190 = vadd.f32 %v94, %v126
    %v191 = vadd.f32 %v95, %v127
    %v192 = vadd.f32 %v96, %v128
    %v193 = vadd.f32 %v97, %v129
    %v194 = vadd.f32 %v98, %v130
    %v195 = vadd.f32 %v99, %v131
    %v196 = vadd.f32 %v100, %v132
    %v197 = vadd.f32 %v101, %v133
    %v198 = vadd.f32 %v102, %v134
    %v199 = vadd.f32 %v103, %v135
    %200 = vst [vmem:[#allocation7] sm:$0xff] %v136
    %201 = vst [vmem:[#allocation7 + $0x8] sm:$0xff] %v137
    %202 = vst [vmem:[#allocation7 + $0x10] sm:$0xff] %v138
    %203 = vst [vmem:[#allocation7 + $0x18] sm:$0xff] %v139
    %204 = vst [vmem:[#allocation7 + $0x20] sm:$0xff] %v140
    %205 = vst [vmem:[#allocation7 + $0x28] sm:$0xff] %v141
    %206 = vst [vmem:[#allocation7 + $0x30] sm:$0xff] %v142
    %207 = vst [vmem:[#allocation7 + $0x38] sm:$0xff] %v143
    %208 = vst [vmem:[#allocation7 + $0x40] sm:$0xff] %v144
    %209 = vst [vmem:[#allocation7 + $0x48] sm:$0xff] %v145
    %210 = vst [vmem:[#allocation7 + $0x50] sm:$0xff] %v146
    %211 = vst [vmem:[#allocation7 + $0x58] sm:$0xff] %v147
    %212 = vst [vmem:[#allocation7 + $0x60] sm:$0xff] %v148
    %213 = vst [vmem:[#allocation7 + $0x68] sm:$0xff] %v149
    %214 = vst [vmem:[#allocation7 + $0x70] sm:$0xff] %v150
    %215 = vst [vmem:[#allocation7 + $0x78] sm:$0xff] %v151
    %216 = vst [vmem:[#allocation7 + $0x80] sm:$0xff] %v152
    %217 = vst [vmem:[#allocation7 + $0x88] sm:$0xff] %v153
    %218 = vst [vmem:[#allocation7 + $0x90] sm:$0xff] %v154
    %219 = vst [vmem:[#allocation7 + $0x98] sm:$0xff] %v155
    %220 = vst [vmem:[#allocation7 + $0xa0] sm:$0xff] %v156
    %221 = vst [vmem:[#allocation7 + $0xa8] sm:$0xff] %v157
    %222 = vst [vmem:[#allocation7 + $0xb0] sm:$0xff] %v158
    %223 = vst [vmem:[#allocation7 + $0xb8] sm:$0xff] %v159
    %224 = vst [vmem:[#allocation7 + $0xc0] sm:$0xff] %v160
    %225 = vst [vmem:[#allocation7 + $0xc8] sm:$0xff] %v161
    %226 = vst [vmem:[#allocation7 + $0xd0] sm:$0xff] %v162
    %227 = vst [vmem:[#allocation7 + $0xd8] sm:$0xff] %v163
    %228 = vst [vmem:[#allocation7 + $0xe0] sm:$0xff] %v164
    %229 = vst [vmem:[#allocation7 + $0xe8] sm:$0xff] %v165
    %230 = vst [vmem:[#allocation7 + $0xf0] sm:$0xff] %v166
    %231 = vst [vmem:[#allocation7 + $0xf8] sm:$0xff] %v167
    %232 = vst [vmem:[#allocation7 + $0x100] sm:$0xff] %v168
    %233 = vst [vmem:[#allocation7 + $0x108] sm:$0xff] %v169
    %234 = vst [vmem:[#allocation7 + $0x110] sm:$0xff] %v170
    %235 = vst [vmem:[#allocation7 + $0x118] sm:$0xff] %v171
    %236 = vst [vmem:[#allocation7 + $0x120] sm:$0xff] %v172
    %237 = vst [vmem:[#allocation7 + $0x128] sm:$0xff] %v173
    %238 = vst [vmem:[#allocation7 + $0x130] sm:$0xff] %v174
    %239 = vst [vmem:[#allocation7 + $0x138] sm:$0xff] %v175
    %240 = vst [vmem:[#allocation7 + $0x140] sm:$0xff] %v176
    %241 = vst [vmem:[#allocation7 + $0x148] sm:$0xff] %v177
    %242 = vst [vmem:[#allocation7 + $0x150] sm:$0xff] %v178
    %243 = vst [vmem:[#allocation7 + $0x158] sm:$0xff] %v179
    %244 = vst [vmem:[#allocation7 + $0x160] sm:$0xff] %v180
    %245 = vst [vmem:[#allocation7 + $0x168] sm:$0xff] %v181
    %246 = vst [vmem:[#allocation7 + $0x170] sm:$0xff] %v182
    %247 = vst [vmem:[#allocation7 + $0x178] sm:$0xff] %v183
    %248 = vst [vmem:[#allocation7 + $0x180] sm:$0xff] %v184
    %249 = vst [vmem:[#allocation7 + $0x188] sm:$0xff] %v185
    %250 = vst [vmem:[#allocation7 + $0x190] sm:$0xff] %v186
    %251 = vst [vmem:[#allocation7 + $0x198] sm:$0xff] %v187
    %252 = vst [vmem:[#allocation7 + $0x1a0] sm:$0xff] %v188
    %253 = vst [vmem:[#allocation7 + $0x1a8] sm:$0xff] %v189
    %254 = vst [vmem:[#allocation7 + $0x1b0] sm:$0xff] %v190
    %255 = vst [vmem:[#allocation7 + $0x1b8] sm:$0xff] %v191
    %256 = vst [vmem:[#allocation7 + $0x1c0] sm:$0xff] %v192
    %257 = vst [vmem:[#allocation7 + $0x1c8] sm:$0xff] %v193
    %258 = vst [vmem:[#allocation7 + $0x1d0] sm:$0xff] %v194
    %259 = vst [vmem:[#allocation7 + $0x1d8] sm:$0xff] %v195
    %260 = vst [vmem:[#allocation7 + $0x1e0] sm:$0xff] %v196
    %261 = vst [vmem:[#allocation7 + $0x1e8] sm:$0xff] %v197
    %262 = vst [vmem:[#allocation7 + $0x1f0] sm:$0xff] %v198
    %263 = vst [vmem:[#allocation7 + $0x1f8] sm:$0xff] %v199
    // Predicated region
    $region18: #{tpu_custom_call.1} parent=1 // pred_check
      _
    $region19: #{tpu_custom_call.1} parent=1 // pred_check_branch
      %265 = sbr.rel (0) target = $region21
    $region20: #{tpu_custom_call.1} parent=1 // pred_region
      %s267 = ssub.s32 8192, 8192
      %268 = vsyncadd [#allocation4], %s267
      %s269 = sshll.u32 [#allocation7], 4
      %s270 = int_to_ptr.vmem [resolvable:$true] %s269
      %275 = dma.vmem_to_hbm [thread:$0]  %s270, 8192, %s2, [#allocation4], 128, 128, 8
    $region21: #{tpu_custom_call.1} parent=1 // pred_fallthru
      _
    // Predicated region
    $region22: #{tpu_custom_call.1} parent=1 // pred_check
      _
    $region23: #{tpu_custom_call.1} parent=1 // pred_check_branch
      %277 = sbr.rel (0) target = $region25
    $region24: #{tpu_custom_call.1} parent=1 // pred_region
      %278 = dma.done [#allocation4], 8192
    $region25: #{tpu_custom_call.1} parent=1 // pred_fallthru
      _
    %279 = vsyncpa [#allocation3], 1
    %280 = vsyncpa [#allocation6], 1
    %281 = vsyncpa [#allocation4], 1

</llo_original>
